<compile_context>
chip_gen: v7x
topology: tpu7x:2x2x1
jax: 0.10.0
libtpu: 0.0.40
codegen_flags: <defaults>
</compile_context>

<pallas_src>
import functools

import jax
import jax.numpy as jnp
from jax.experimental import pallas as pl
from jax.experimental.pallas import tpu as pltpu


def _round_up(x: int, m: int) -> int:
    return ((x + m - 1) // m) * m


def _device_kind() -> str:
    try:
        return jax.devices()[0].device_kind.lower()
    except Exception:
        return ""


def _mask_build_dtype():
    # v5-class (and older) chips have no bf16 VALU: build masks in f32 there
    # and pack once for the MXU; v6e/v7x build directly in bf16.
    kind = _device_kind()
    if any(tag in kind for tag in ("v2", "v3", "v4", "v5")):
        return jnp.float32
    return jnp.bfloat16


def _vmem_limit_bytes(table_bytes: int, tile_bytes: int) -> int:
    # Generation-aware VMEM budget derived from actual buffer sizes
    # (v5e/v6e: 128 MiB physical VMEM, v7x: 64 MiB per TensorCore).
    kind = _device_kind()
    phys = (64 << 20) if "v7" in kind else (128 << 20)
    need = 2 * table_bytes + 4 * tile_bytes + (8 << 20)   # dbl-buffer worst case + margin
    return int(min(max(need, 32 << 20), phys - (16 << 20)))


def mf_kernel(idx_ref, wt_ref, out_ref, *, mask_dtype):
    """One batch tile of the BTL forward pass.

    idx_ref : (1, 2, 2*TB) int32. Row 0 ("pos") = [u ; n_users+i],
              row 1 ("neg") = [-1 sentinel ; n_users+j]. The -1 sentinel never
              matches a table row, so columns 0..TB-1 gather U[u] and columns
              TB..2TB-1 gather V[i]-V[j] from one fused signed one-hot.
    wt_ref  : (D_pad, N_pad) bf16 — transposed concat([U, V], 0), zero padded.
    out_ref : (1, 1, TB) f32 — lane-dense sigmoid scores.
    """
    tb = idx_ref.shape[-1] // 2
    n_pad = wt_ref.shape[1]

    ids = jax.lax.broadcasted_iota(jnp.int32, (n_pad, 1), 0)          # (N_pad, 1)
    idx = idx_ref[0]                                                  # (2, 2*TB)

    # Signed one-hot gather mask built directly in the target dtype (values are
    # exactly 0 / +1 / -1); no concat materialization, no extra cast pass.
    oh = ((idx[0:1, :] == ids).astype(mask_dtype)
          - (idx[1:2, :] == ids).astype(mask_dtype))                  # (N_pad, 2*TB)

    # Fused gather: one MXU pass yields U[u]^T and (V[i]-V[j])^T columns,
    # bf16 operands with f32 accumulation.
    emb = jnp.dot(wt_ref[...], oh.astype(jnp.bfloat16),
                  preferred_element_type=jnp.float32)                 # (D_pad, 2*TB)

    # BTL score: per-column dot product (sublane reduce -> lane-dense row),
    # sigmoid in f32 (EUP), lane-dense store.
    scores = jnp.sum(emb[:, :tb] * emb[:, tb:], axis=0, keepdims=True)  # (1, TB)
    out_ref[...] = jax.nn.sigmoid(scores).reshape(1, 1, tb)


def pack_tables(U, V):
    """One-time parameter prep (hoisted out of the forward, per perf review):
    transposed concat([U, V], axis=0), zero padded to (D_pad, N_pad), bf16."""
    n_users, d = U.shape
    n_items, d_v = V.shape
    assert d_v == d
    # TODO(synk): on v6e/v7x pad d (and contraction chunks) to multiples of 256
    # when d > 128 to fill the 256x256 MXU; irrelevant for d <= 128.
    d_pad = _round_up(d, 128)
    n_pad = _round_up(n_users + n_items, 128)
    wt = jnp.zeros((d_pad, n_pad), jnp.float32)
    wt = wt.at[:d, :n_users].set(U.T.astype(jnp.float32))
    wt = wt.at[:d, n_users:n_users + n_items].set(V.T.astype(jnp.float32))
    return wt.astype(jnp.bfloat16)


def mf_forward(u, i, j, wt, n_users, *, tile_b=512):
    """forward(u, i, j) = sigmoid(sum_d(U[u] * (V[i] - V[j])))."""
    d_pad, n_pad = wt.shape
    B = u.shape[0]

    # Batch tile: multiple of 128 so index loads / output stores are lane dense
    # and the emb[:, :tb] / emb[:, tb:] slices stay on lane-tile boundaries.
    tb = min(_round_up(max(tile_b, 128), 128), _round_up(B, 128))
    b_pad = _round_up(B, tb)
    num_tiles = pl.cdiv(b_pad, tb)

    def pad_idx(x, offset):
        x = x.astype(jnp.int32) + offset
        # Padded lanes get the -1 sentinel -> all-zero one-hot -> score 0.5,
        # sliced off below (no reliance on padded rows cancelling).
        return jnp.pad(x, (0, b_pad - B), constant_values=-1).reshape(num_tiles, tb)

    u_t = pad_idx(u, 0)
    i_t = pad_idx(i, n_users)       # item rows live at offset n_users
    j_t = pad_idx(j, n_users)
    pos = jnp.concatenate([u_t, i_t], axis=1)                        # (T, 2*TB)
    neg = jnp.concatenate([jnp.full_like(u_t, -1), j_t], axis=1)     # (T, 2*TB)
    idx = jnp.stack([pos, neg], axis=1)                              # (T, 2, 2*TB)

    idx_spec = pl.BlockSpec((1, 2, 2 * tb), lambda b: (b, 0, 0))
    out_spec = pl.BlockSpec((1, 1, tb), lambda b: (b, 0, 0))

    table_bytes = d_pad * n_pad * 2
    tile_bytes = (2 * 2 * tb * 4                      # index tile (int32)
                  + tb * 4                            # output tile (f32)
                  + n_pad * 2 * tb * (2 + 4)          # one-hot mask intermediates
                  + d_pad * 2 * tb * 4)               # emb intermediate (f32)

    kernel = functools.partial(mf_kernel, mask_dtype=_mask_build_dtype())
    common = dict(
        out_shape=jax.ShapeDtypeStruct((num_tiles, 1, tb), jnp.float32),
        grid=(num_tiles,),
        out_specs=out_spec,
        compiler_params=pltpu.CompilerParams(
            dimension_semantics=("parallel",),        # megacore sharding on v7x
            vmem_limit_bytes=_vmem_limit_bytes(table_bytes, tile_bytes),
        ),
    )

    try:
        # Single-buffer the grid-constant resident table (halves its VMEM
        # footprint — matters most on v7x's 64 MiB / TensorCore).
        wt_spec = pl.BlockSpec((d_pad, n_pad), lambda b: (0, 0),
                               pipeline_mode=pl.Buffered(1))
        out = pl.pallas_call(kernel, in_specs=[idx_spec, wt_spec], **common)(idx, wt)
    except Exception:
        # Fallback if this lowering rejects Buffered(1): default double-buffered
        # resident table — still only DMA'd once (constant block index).
        wt_spec = pl.BlockSpec((d_pad, n_pad), lambda b: (0, 0))
        out = pl.pallas_call(kernel, in_specs=[idx_spec, wt_spec], **common)(idx, wt)

    return out.reshape(b_pad)[:B]


if __name__ == "__main__":
    # Small shapes consistent with the module: n_users, n_items, latent d, batch B.
    n_users, n_items, d, B = 32, 64, 32, 16

    key = jax.random.PRNGKey(0)
    k_u, k_v, k1, k2, k3 = jax.random.split(key, 5)

    # Deterministic parameter init matching __init__: randn(n, d) / sqrt(d).
    U = jax.random.normal(k_u, (n_users, d), jnp.float32) / jnp.sqrt(jnp.float32(d))
    V = jax.random.normal(k_v, (n_items, d), jnp.float32) / jnp.sqrt(jnp.float32(d))

    # Deterministic example index inputs.
    u = jax.random.randint(k1, (B,), 0, n_users, jnp.int32)
    i = jax.random.randint(k2, (B,), 0, n_items, jnp.int32)
    j = jax.random.randint(k3, (B,), 0, n_items, jnp.int32)

    # One-time parameter packing (hoisted out of the per-call forward).
    wt = pack_tables(U, V)

    out = mf_forward(u, i, j, wt, n_users)
    out = jax.block_until_ready(out)

    # Exact reference for what the MXU consumes (bf16-cast tables, f32 accum).
    U_bf = U.astype(jnp.bfloat16).astype(jnp.float32)
    V_bf = V.astype(jnp.bfloat16).astype(jnp.float32)
    ref_bf = jax.nn.sigmoid(jnp.sum(U_bf[u] * (V_bf[i] - V_bf[j]), axis=1))
    # Full-precision PyTorch-equivalent reference (bf16 table cast => loose tol).
    ref_f32 = jax.nn.sigmoid(jnp.sum(U[u] * (V[i] - V[j]), axis=1))

    assert out.shape == (B,), out.shape
    assert out.dtype == jnp.float32, out.dtype
    assert jnp.allclose(out, ref_bf, atol=1e-4, rtol=1e-4), (out, ref_bf)
    assert jnp.allclose(out, ref_f32, atol=2e-2, rtol=2e-2), (out, ref_f32)

    print("KERNEL_OK")
</pallas_src>

<mosaic_0001>
module attributes {stable_mosaic.version = 11 : i64} {
  func.func @mf_kernel(%arg0: i32, %arg1: memref<1x2x256xi32, #tpu.memory_space<vmem>>, %arg2: memref<128x128xbf16, #tpu.memory_space<vmem>>, %arg3: memref<1x1x128xf32, #tpu.memory_space<vmem>>) attributes {dimension_semantics = [#tpu.dimension_semantics<parallel>], iteration_bounds = array<i64: 1>, scalar_prefetch = 0 : i64, scratch_operands = 0 : i64, tpu.core_type = #tpu.core_type<tc>, window_params = [{transform_indices = @transform_0, window_bounds = array<i64: 1, 2, 256>}, {pipeline_mode = #tpu.pipeline_mode<synchronous>, transform_indices = @transform_1, window_bounds = array<i64: 128, 128>}, {transform_indices = @transform_2, window_bounds = array<i64: 1, 1, 128>}]} {
    %0 = tpu.iota {dimensions = array<i32: 0>} : vector<128x1xi32>
    %c0 = arith.constant 0 : index
    %c0_0 = arith.constant 0 : index
    %c0_1 = arith.constant 0 : index
    %1 = vector.load %arg1[%c0, %c0_0, %c0_1] : memref<1x2x256xi32, #tpu.memory_space<vmem>>, vector<1x2x256xi32>
    %2 = vector.shape_cast %1 : vector<1x2x256xi32> to vector<2x256xi32>
    %3 = vector.extract_strided_slice %2 {offsets = [0, 0], sizes = [1, 256], strides = [1, 1]} : vector<2x256xi32> to vector<1x256xi32>
    %4 = vector.broadcast %3 : vector<1x256xi32> to vector<128x256xi32>
    %5 = vector.broadcast %0 : vector<128x1xi32> to vector<128x256xi32>
    %6 = arith.cmpi eq, %4, %5 : vector<128x256xi32>
    %7 = arith.extui %6 : vector<128x256xi1> to vector<128x256xi32>
    %8 = arith.sitofp %7 : vector<128x256xi32> to vector<128x256xf32>
    %9 = arith.truncf %8 : vector<128x256xf32> to vector<128x256xbf16>
    %10 = vector.extract_strided_slice %2 {offsets = [1, 0], sizes = [1, 256], strides = [1, 1]} : vector<2x256xi32> to vector<1x256xi32>
    %11 = vector.broadcast %10 : vector<1x256xi32> to vector<128x256xi32>
    %12 = vector.broadcast %0 : vector<128x1xi32> to vector<128x256xi32>
    %13 = arith.cmpi eq, %11, %12 : vector<128x256xi32>
    %14 = arith.extui %13 : vector<128x256xi1> to vector<128x256xi32>
    %15 = arith.sitofp %14 : vector<128x256xi32> to vector<128x256xf32>
    %16 = arith.truncf %15 : vector<128x256xf32> to vector<128x256xbf16>
    %17 = arith.subf %9, %16 : vector<128x256xbf16>
    %c0_2 = arith.constant 0 : index
    %c0_3 = arith.constant 0 : index
    %18 = vector.load %arg2[%c0_2, %c0_3] : memref<128x128xbf16, #tpu.memory_space<vmem>>, vector<128x128xbf16>
    %cst = arith.constant dense<0.000000e+00> : vector<128x256xf32>
    %19 = tpu.matmul %18, %17, %cst {dimension_numbers = #tpu.dot_dimension_numbers<[1], [0], [0], [1], [0, 0, 1, 1], [], []>} : vector<128x128xbf16>, vector<128x256xbf16>, vector<128x256xf32> -> vector<128x256xf32>
    %20 = vector.extract_strided_slice %19 {offsets = [0, 0], sizes = [128, 128], strides = [1, 1]} : vector<128x256xf32> to vector<128x128xf32>
    %21 = vector.extract_strided_slice %19 {offsets = [0, 128], sizes = [128, 128], strides = [1, 1]} : vector<128x256xf32> to vector<128x128xf32>
    %22 = arith.mulf %20, %21 : vector<128x128xf32>
    %cst_4 = arith.constant dense<0.000000e+00> : vector<128xf32>
    %23 = vector.multi_reduction <add>, %22, %cst_4 [0] : vector<128x128xf32> to vector<128xf32>
    %24 = vector.shape_cast %23 : vector<128xf32> to vector<1x128xf32>
    %25 = arith.negf %24 : vector<1x128xf32>
    %26 = math.exp %25 : vector<1x128xf32>
    %cst_5 = arith.constant 1.000000e+00 : f32
    %27 = vector.broadcast %cst_5 : f32 to vector<1x128xf32>
    %28 = arith.addf %27, %26 : vector<1x128xf32>
    %29 = arith.divf %27, %28 : vector<1x128xf32>
    %30 = vector.shape_cast %29 : vector<1x128xf32> to vector<1x1x128xf32>
    %c0_6 = arith.constant 0 : index
    %c0_7 = arith.constant 0 : index
    %c0_8 = arith.constant 0 : index
    %31 = vector.load %arg3[%c0_6, %c0_7, %c0_8] : memref<1x1x128xf32, #tpu.memory_space<vmem>>, vector<1x1x128xf32>
    tpu.vector_store %arg3[%c0_6, %c0_7, %c0_8], %30 {strides = array<i32>} : memref<1x1x128xf32, #tpu.memory_space<vmem>>, vector<1x1x128xf32>,
    return
  }
  func.func @transform_0(%arg0: i32) -> (i32, i32, i32) {
    %c0_i32 = arith.constant 0 : i32
    %c0_i32_0 = arith.constant 0 : i32
    %c0_i32_1 = arith.constant 0 : i32
    return %arg0, %c0_i32, %c0_i32_0 : i32, i32, i32
  }
  func.func @transform_1(%arg0: i32) -> (i32, i32) {
    %c0_i32 = arith.constant 0 : i32
    %c0_i32_0 = arith.constant 0 : i32
    %c0_i32_1 = arith.constant 0 : i32
    return %c0_i32, %c0_i32_0 : i32, i32
  }
  func.func @transform_2(%arg0: i32) -> (i32, i32, i32) {
    %c0_i32 = arith.constant 0 : i32
    %c0_i32_0 = arith.constant 0 : i32
    %c0_i32_1 = arith.constant 0 : i32
    return %arg0, %c0_i32, %c0_i32_0 : i32, i32, i32
  }
}

module attributes {stable_mosaic.version = 11 : i64} {
  func.func @mf_kernel(%arg0: i32, %arg1: memref<1x2x256xi32, #tpu.memory_space<vmem>>, %arg2: memref<128x128xbf16, #tpu.memory_space<vmem>>, %arg3: memref<1x1x128xf32, #tpu.memory_space<vmem>>) attributes {dimension_semantics = [#tpu.dimension_semantics<parallel>], iteration_bounds = array<i64: 1>, scalar_prefetch = 0 : i64, scratch_operands = 0 : i64, tpu.core_type = #tpu.core_type<tc>, window_params = [{transform_indices = @transform_0, window_bounds = array<i64: 1, 2, 256>}, {pipeline_mode = #tpu.pipeline_mode<synchronous>, transform_indices = @transform_1, window_bounds = array<i64: 128, 128>}, {transform_indices = @transform_2, window_bounds = array<i64: 1, 1, 128>}]} {
    %0 = tpu.iota {dimensions = array<i32: 0>} : vector<128x1xi32>
    %c0 = arith.constant 0 : index
    %c0_0 = arith.constant 0 : index
    %c0_1 = arith.constant 0 : index
    %1 = vector.load %arg1[%c0, %c0_0, %c0_1] : memref<1x2x256xi32, #tpu.memory_space<vmem>>, vector<1x2x256xi32>
    %2 = vector.shape_cast %1 : vector<1x2x256xi32> to vector<2x256xi32>
    %3 = vector.extract_strided_slice %2 {offsets = [0, 0], sizes = [1, 256], strides = [1, 1]} : vector<2x256xi32> to vector<1x256xi32>
    %4 = vector.broadcast %3 : vector<1x256xi32> to vector<128x256xi32>
    %5 = vector.broadcast %0 : vector<128x1xi32> to vector<128x256xi32>
    %6 = arith.cmpi eq, %4, %5 : vector<128x256xi32>
    %7 = arith.extui %6 : vector<128x256xi1> to vector<128x256xi32>
    %8 = arith.sitofp %7 : vector<128x256xi32> to vector<128x256xf32>
    %9 = arith.truncf %8 : vector<128x256xf32> to vector<128x256xbf16>
    %10 = vector.extract_strided_slice %2 {offsets = [1, 0], sizes = [1, 256], strides = [1, 1]} : vector<2x256xi32> to vector<1x256xi32>
    %11 = vector.broadcast %10 : vector<1x256xi32> to vector<128x256xi32>
    %12 = vector.broadcast %0 : vector<128x1xi32> to vector<128x256xi32>
    %13 = arith.cmpi eq, %11, %12 : vector<128x256xi32>
    %14 = arith.extui %13 : vector<128x256xi1> to vector<128x256xi32>
    %15 = arith.sitofp %14 : vector<128x256xi32> to vector<128x256xf32>
    %16 = arith.truncf %15 : vector<128x256xf32> to vector<128x256xbf16>
    %17 = arith.subf %9, %16 : vector<128x256xbf16>
    %c0_2 = arith.constant 0 : index
    %c0_3 = arith.constant 0 : index
    %18 = vector.load %arg2[%c0_2, %c0_3] : memref<128x128xbf16, #tpu.memory_space<vmem>>, vector<128x128xbf16>
    %cst = arith.constant dense<0.000000e+00> : vector<128x256xf32>
    %19 = tpu.matmul %18, %17, %cst {dimension_numbers = #tpu.dot_dimension_numbers<[1], [0], [0], [1], [0, 0, 1, 1], [], []>} : vector<128x128xbf16>, vector<128x256xbf16>, vector<128x256xf32> -> vector<128x256xf32>
    %20 = vector.extract_strided_slice %19 {offsets = [0, 0], sizes = [128, 128], strides = [1, 1]} : vector<128x256xf32> to vector<128x128xf32>
    %21 = vector.extract_strided_slice %19 {offsets = [0, 128], sizes = [128, 128], strides = [1, 1]} : vector<128x256xf32> to vector<128x128xf32>
    %22 = arith.mulf %20, %21 : vector<128x128xf32>
    %cst_4 = arith.constant dense<0.000000e+00> : vector<128xf32>
    %23 = vector.multi_reduction <add>, %22, %cst_4 [0] : vector<128x128xf32> to vector<128xf32>
    %24 = vector.shape_cast %23 : vector<128xf32> to vector<1x128xf32>
    %25 = arith.negf %24 : vector<1x128xf32>
    %26 = math.exp %25 : vector<1x128xf32>
    %cst_5 = arith.constant 1.000000e+00 : f32
    %27 = vector.broadcast %cst_5 : f32 to vector<1x128xf32>
    %28 = arith.addf %27, %26 : vector<1x128xf32>
    %29 = arith.divf %27, %28 : vector<1x128xf32>
    %30 = vector.shape_cast %29 : vector<1x128xf32> to vector<1x1x128xf32>
    %c0_6 = arith.constant 0 : index
    %c0_7 = arith.constant 0 : index
    %c0_8 = arith.constant 0 : index
    %31 = vector.load %arg3[%c0_6, %c0_7, %c0_8] : memref<1x1x128xf32, #tpu.memory_space<vmem>>, vector<1x1x128xf32>
    tpu.vector_store %arg3[%c0_6, %c0_7, %c0_8], %30 {strides = array<i32>} : memref<1x1x128xf32, #tpu.memory_space<vmem>>, vector<1x1x128xf32>,
    return
  }
  func.func @transform_0(%arg0: i32) -> (i32, i32, i32) {
    %c0_i32 = arith.constant 0 : i32
    %c0_i32_0 = arith.constant 0 : i32
    %c0_i32_1 = arith.constant 0 : i32
    return %arg0, %c0_i32, %c0_i32_0 : i32, i32, i32
  }
  func.func @transform_1(%arg0: i32) -> (i32, i32) {
    %c0_i32 = arith.constant 0 : i32
    %c0_i32_0 = arith.constant 0 : i32
    %c0_i32_1 = arith.constant 0 : i32
    return %c0_i32, %c0_i32_0 : i32, i32
  }
  func.func @transform_2(%arg0: i32) -> (i32, i32, i32) {
    %c0_i32 = arith.constant 0 : i32
    %c0_i32_0 = arith.constant 0 : i32
    %c0_i32_1 = arith.constant 0 : i32
    return %arg0, %c0_i32, %c0_i32_0 : i32, i32, i32
  }
}

</mosaic_0001>

<llo_original>
// kernel: tpu_custom_call.1
$region0: #{tpu_custom_call.1}
  #allocation0 [shape = 'u32[]', space=smem, size = 0x4, offset = 0x4, fixed_abs, tag = 'smem constant byte address 0x4 - core index']
  #allocation1 [shape = 'u32[144,128]{1,0:T(1,128)}', space=vmem, size = 0x12000, scoped, tag = 'internal scratch']
  %s0 = inlined_call_operand.hbm [shape: s32[1,2,256], index: 0, kind: input, shape index: {}]
  %s1 = inlined_call_operand.hbm [shape: bf16[128,128], index: 1, kind: input, shape index: {}]
  %s2 = inlined_call_operand.hbm [shape: f32[1,1,128], index: 2, kind: output, shape index: {}]
  %s3 = sld [smem:[#allocation0]]
  $region26: #{tpu_custom_call.1} parent=0
    _
  %s5 = ssub.s32 1, %s3
  %s6 = scalar_select 0, %s5, %s3
  $region1: #{tpu_custom_call.1} parent=0
    #allocation2 [shape = 'u8[2048]{0}', space=vmem, size = 0x800, scoped, tag = 'input window, operand 0, single buffered']
    #allocation3 [shape = 's32[1]{0}', space=sflag, size = 0x4, scoped, tag = 'scoped memory for tpu_custom_call.1']
    #allocation4 [shape = 's32[1]{0}', space=sflag, size = 0x4, scoped, tag = 'scoped memory for tpu_custom_call.1']
    #allocation5 [shape = 'u8[32768]{0}', space=vmem, size = 0x8000, scoped, tag = 'input window, operand 1, single buffered']
    #allocation6 [shape = 's32[1]{0}', space=sflag, size = 0x4, scoped, tag = 'scoped memory for tpu_custom_call.1']
    #allocation7 [shape = 'u8[512]{0}', space=vmem, size = 0x400, scoped, tag = 'output window, operand 0, single buffered']
    %7 = vsyncpa [#allocation3], 0
    %8 = vsyncpa [#allocation6], 0
    %9 = vsyncpa [#allocation4], 0
    // Predicated region
    $region2: #{tpu_custom_call.1} parent=1 // pred_check
      _
    $region3: #{tpu_custom_call.1} parent=1 // pred_check_branch
      %11 = sbr.rel (0) target = $region5
    $region4: #{tpu_custom_call.1} parent=1 // pred_region
      %s13 = ssub.s32 64, 64
      %14 = vsyncadd [#allocation3], %s13
      %s16 = sshll.u32 [#allocation2], 4
      %s17 = int_to_ptr.vmem [resolvable:$true] %s16
      %19 = dma.hbm_to_vmem [thread:$0]  %s0, 64, %s17, [#allocation3]
    $region5: #{tpu_custom_call.1} parent=1 // pred_fallthru
      _
    // Predicated region
    $region6: #{tpu_custom_call.1} parent=1 // pred_check
      _
    $region7: #{tpu_custom_call.1} parent=1 // pred_check_branch
      %21 = sbr.rel (0) target = $region9
    $region8: #{tpu_custom_call.1} parent=1 // pred_region
      %s23 = ssub.s32 1024, 1024
      %24 = vsyncadd [#allocation6], %s23
      %s25 = sshll.u32 [#allocation5], 4
      %s26 = int_to_ptr.vmem [resolvable:$true] %s25
      %31 = dma.hbm_to_vmem [thread:$0]  %s1, 1024, %s26, [#allocation6], 64, 64, 4
    $region9: #{tpu_custom_call.1} parent=1 // pred_fallthru
      _
    // Predicated region
    $region10: #{tpu_custom_call.1} parent=1 // pred_check
      _
    $region11: #{tpu_custom_call.1} parent=1 // pred_check_branch
      %33 = sbr.rel (0) target = $region13
    $region12: #{tpu_custom_call.1} parent=1 // pred_region
      %34 = dma.done [#allocation3], 64
    $region13: #{tpu_custom_call.1} parent=1 // pred_fallthru
      _
    // Predicated region
    $region14: #{tpu_custom_call.1} parent=1 // pred_check
      _
    $region15: #{tpu_custom_call.1} parent=1 // pred_check_branch
      %36 = sbr.rel (0) target = $region17
    $region16: #{tpu_custom_call.1} parent=1 // pred_region
      %37 = dma.done [#allocation6], 1024
    $region17: #{tpu_custom_call.1} parent=1 // pred_fallthru
      _
    %v39 = vlaneseq
    %v40 = vshrl.u32 %v39, 7
    %v41 = vadd.s32 %v40, 8
    %v42 = vadd.s32 %v40, 16
    %v43 = vadd.s32 %v40, 24
    %v44 = vadd.s32 %v40, 32
    %v45 = vadd.s32 %v40, 40
    %v46 = vadd.s32 %v40, 48
    %v47 = vadd.s32 %v40, 56
    %v48 = vadd.s32 %v40, 64
    %v49 = vadd.s32 %v40, 72
    %v50 = vadd.s32 %v40, 80
    %v51 = vadd.s32 %v40, 88
    %v52 = vadd.s32 %v40, 96
    %v53 = vadd.s32 %v40, 104
    %v54 = vadd.s32 %v40, 112
    %v55 = vadd.s32 %v40, 120
    %v56 = vld [vmem:[#allocation2] sm:$0xf]
    %v57 = vlaneseq
    %v58 = vshrl.u32 %v57, 7
    %v59 = vsub.s32 0, %v58
    %v60 = vrot.slane %v56, %v59
    %v61 = vlaneseq
    %v62 = vshrl.u32 %v61, 7
    %v63 = vsub.s32 2, %v62
    %v64 = vrot.slane %v56, %v63
    %v65 = vlaneseq
    %v66 = vshrl.u32 %v65, 7
    %v67 = vsub.s32 0, %v66
    %v68 = vrot.slane %v60, %v67
    %v69 = vlaneseq
    %v70 = vshrl.u32 %v69, 7
    %v71 = vsub.s32 0, %v70
    %v72 = vrot.slane %v64, %v71
    %vm73 = vcmp.eq.s32.totalorder %v68, %v40
    %vm74 = vcmp.eq.s32.totalorder %v72, %v40
    %vm75 = vcmp.eq.s32.totalorder %v68, %v41
    %vm76 = vcmp.eq.s32.totalorder %v72, %v41
    %vm77 = vcmp.eq.s32.totalorder %v68, %v42
    %vm78 = vcmp.eq.s32.totalorder %v72, %v42
    %vm79 = vcmp.eq.s32.totalorder %v68, %v43
    %vm80 = vcmp.eq.s32.totalorder %v72, %v43
    %vm81 = vcmp.eq.s32.totalorder %v68, %v44
    %vm82 = vcmp.eq.s32.totalorder %v72, %v44
    %vm83 = vcmp.eq.s32.totalorder %v68, %v45
    %vm84 = vcmp.eq.s32.totalorder %v72, %v45
    %vm85 = vcmp.eq.s32.totalorder %v68, %v46
    %vm86 = vcmp.eq.s32.totalorder %v72, %v46
    %vm87 = vcmp.eq.s32.totalorder %v68, %v47
    %vm88 = vcmp.eq.s32.totalorder %v72, %v47
    %vm89 = vcmp.eq.s32.totalorder %v68, %v48
    %vm90 = vcmp.eq.s32.totalorder %v72, %v48
    %vm91 = vcmp.eq.s32.totalorder %v68, %v49
    %vm92 = vcmp.eq.s32.totalorder %v72, %v49
    %vm93 = vcmp.eq.s32.totalorder %v68, %v50
    %vm94 = vcmp.eq.s32.totalorder %v72, %v50
    %vm95 = vcmp.eq.s32.totalorder %v68, %v51
    %vm96 = vcmp.eq.s32.totalorder %v72, %v51
    %vm97 = vcmp.eq.s32.totalorder %v68, %v52
    %vm98 = vcmp.eq.s32.totalorder %v72, %v52
    %vm99 = vcmp.eq.s32.totalorder %v68, %v53
    %vm100 = vcmp.eq.s32.totalorder %v72, %v53
    %vm101 = vcmp.eq.s32.totalorder %v68, %v54
    %vm102 = vcmp.eq.s32.totalorder %v72, %v54
    %vm103 = vcmp.eq.s32.totalorder %v68, %v55
    %vm104 = vcmp.eq.s32.totalorder %v72, %v55
    %v105 = vsel %vm73, 1, 0
    %v106 = vsel %vm74, 1, 0
    %v107 = vsel %vm75, 1, 0
    %v108 = vsel %vm76, 1, 0
    %v109 = vsel %vm77, 1, 0
    %v110 = vsel %vm78, 1, 0
    %v111 = vsel %vm79, 1, 0
    %v112 = vsel %vm80, 1, 0
    %v113 = vsel %vm81, 1, 0
    %v114 = vsel %vm82, 1, 0
    %v115 = vsel %vm83, 1, 0
    %v116 = vsel %vm84, 1, 0
    %v117 = vsel %vm85, 1, 0
    %v118 = vsel %vm86, 1, 0
    %v119 = vsel %vm87, 1, 0
    %v120 = vsel %vm88, 1, 0
    %v121 = vsel %vm89, 1, 0
    %v122 = vsel %vm90, 1, 0
    %v123 = vsel %vm91, 1, 0
    %v124 = vsel %vm92, 1, 0
    %v125 = vsel %vm93, 1, 0
    %v126 = vsel %vm94, 1, 0
    %v127 = vsel %vm95, 1, 0
    %v128 = vsel %vm96, 1, 0
    %v129 = vsel %vm97, 1, 0
    %v130 = vsel %vm98, 1, 0
    %v131 = vsel %vm99, 1, 0
    %v132 = vsel %vm100, 1, 0
    %v133 = vsel %vm101, 1, 0
    %v134 = vsel %vm102, 1, 0
    %v135 = vsel %vm103, 1, 0
    %v136 = vsel %vm104, 1, 0
    %v137 = vcvt.s32.f32 %v105
    %v138 = vcvt.s32.f32 %v106
    %v139 = vcvt.s32.f32 %v107
    %v140 = vcvt.s32.f32 %v108
    %v141 = vcvt.s32.f32 %v109
    %v142 = vcvt.s32.f32 %v110
    %v143 = vcvt.s32.f32 %v111
    %v144 = vcvt.s32.f32 %v112
    %v145 = vcvt.s32.f32 %v113
    %v146 = vcvt.s32.f32 %v114
    %v147 = vcvt.s32.f32 %v115
    %v148 = vcvt.s32.f32 %v116
    %v149 = vcvt.s32.f32 %v117
    %v150 = vcvt.s32.f32 %v118
    %v151 = vcvt.s32.f32 %v119
    %v152 = vcvt.s32.f32 %v120
    %v153 = vcvt.s32.f32 %v121
    %v154 = vcvt.s32.f32 %v122
    %v155 = vcvt.s32.f32 %v123
    %v156 = vcvt.s32.f32 %v124
    %v157 = vcvt.s32.f32 %v125
    %v158 = vcvt.s32.f32 %v126
    %v159 = vcvt.s32.f32 %v127
    %v160 = vcvt.s32.f32 %v128
    %v161 = vcvt.s32.f32 %v129
    %v162 = vcvt.s32.f32 %v130
    %v163 = vcvt.s32.f32 %v131
    %v164 = vcvt.s32.f32 %v132
    %v165 = vcvt.s32.f32 %v133
    %v166 = vcvt.s32.f32 %v134
    %v167 = vcvt.s32.f32 %v135
    %v168 = vcvt.s32.f32 %v136
    %v169 = vpack.c.bf16 %v139, %v137
    %v170 = vpack.c.bf16 %v140, %v138
    %v171 = vpack.c.bf16 %v143, %v141
    %v172 = vpack.c.bf16 %v144, %v142
    %v173 = vpack.c.bf16 %v147, %v145
    %v174 = vpack.c.bf16 %v148, %v146
    %v175 = vpack.c.bf16 %v151, %v149
    %v176 = vpack.c.bf16 %v152, %v150
    %v177 = vpack.c.bf16 %v155, %v153
    %v178 = vpack.c.bf16 %v156, %v154
    %v179 = vpack.c.bf16 %v159, %v157
    %v180 = vpack.c.bf16 %v160, %v158
    %v181 = vpack.c.bf16 %v163, %v161
    %v182 = vpack.c.bf16 %v164, %v162
    %v183 = vpack.c.bf16 %v167, %v165
    %v184 = vpack.c.bf16 %v168, %v166
    %v185 = vlaneseq
    %v186 = vshrl.u32 %v185, 7
    %v187 = vsub.s32 1, %v186
    %v188 = vrot.slane %v56, %v187
    %v189 = vlaneseq
    %v190 = vshrl.u32 %v189, 7
    %v191 = vsub.s32 3, %v190
    %v192 = vrot.slane %v56, %v191
    %v193 = vlaneseq
    %v194 = vshrl.u32 %v193, 7
    %v195 = vsub.s32 1, %v194
    %v196 = vrot.slane %v188, %v195
    %v197 = vlaneseq
    %v198 = vshrl.u32 %v197, 7
    %v199 = vsub.s32 1, %v198
    %v200 = vrot.slane %v192, %v199
    %vm201 = vcmp.eq.s32.totalorder %v196, %v40
    %vm202 = vcmp.eq.s32.totalorder %v200, %v40
    %vm203 = vcmp.eq.s32.totalorder %v196, %v41
    %vm204 = vcmp.eq.s32.totalorder %v200, %v41
    %vm205 = vcmp.eq.s32.totalorder %v196, %v42
    %vm206 = vcmp.eq.s32.totalorder %v200, %v42
    %vm207 = vcmp.eq.s32.totalorder %v196, %v43
    %vm208 = vcmp.eq.s32.totalorder %v200, %v43
    %vm209 = vcmp.eq.s32.totalorder %v196, %v44
    %vm210 = vcmp.eq.s32.totalorder %v200, %v44
    %vm211 = vcmp.eq.s32.totalorder %v196, %v45
    %vm212 = vcmp.eq.s32.totalorder %v200, %v45
    %vm213 = vcmp.eq.s32.totalorder %v196, %v46
    %vm214 = vcmp.eq.s32.totalorder %v200, %v46
    %vm215 = vcmp.eq.s32.totalorder %v196, %v47
    %vm216 = vcmp.eq.s32.totalorder %v200, %v47
    %vm217 = vcmp.eq.s32.totalorder %v196, %v48
    %vm218 = vcmp.eq.s32.totalorder %v200, %v48
    %vm219 = vcmp.eq.s32.totalorder %v196, %v49
    %vm220 = vcmp.eq.s32.totalorder %v200, %v49
    %vm221 = vcmp.eq.s32.totalorder %v196, %v50
    %vm222 = vcmp.eq.s32.totalorder %v200, %v50
    %vm223 = vcmp.eq.s32.totalorder %v196, %v51
    %vm224 = vcmp.eq.s32.totalorder %v200, %v51
    %vm225 = vcmp.eq.s32.totalorder %v196, %v52
    %vm226 = vcmp.eq.s32.totalorder %v200, %v52
    %vm227 = vcmp.eq.s32.totalorder %v196, %v53
    %vm228 = vcmp.eq.s32.totalorder %v200, %v53
    %vm229 = vcmp.eq.s32.totalorder %v196, %v54
    %vm230 = vcmp.eq.s32.totalorder %v200, %v54
    %vm231 = vcmp.eq.s32.totalorder %v196, %v55
    %vm232 = vcmp.eq.s32.totalorder %v200, %v55
    %v233 = vsel %vm201, 1, 0
    %v234 = vsel %vm202, 1, 0
    %v235 = vsel %vm203, 1, 0
    %v236 = vsel %vm204, 1, 0
    %v237 = vsel %vm205, 1, 0
    %v238 = vsel %vm206, 1, 0
    %v239 = vsel %vm207, 1, 0
    %v240 = vsel %vm208, 1, 0
    %v241 = vsel %vm209, 1, 0
    %v242 = vsel %vm210, 1, 0
    %v243 = vsel %vm211, 1, 0
    %v244 = vsel %vm212, 1, 0
    %v245 = vsel %vm213, 1, 0
    %v246 = vsel %vm214, 1, 0
    %v247 = vsel %vm215, 1, 0
    %v248 = vsel %vm216, 1, 0
    %v249 = vsel %vm217, 1, 0
    %v250 = vsel %vm218, 1, 0
    %v251 = vsel %vm219, 1, 0
    %v252 = vsel %vm220, 1, 0
    %v253 = vsel %vm221, 1, 0
    %v254 = vsel %vm222, 1, 0
    %v255 = vsel %vm223, 1, 0
    %v256 = vsel %vm224, 1, 0
    %v257 = vsel %vm225, 1, 0
    %v258 = vsel %vm226, 1, 0
    %v259 = vsel %vm227, 1, 0
    %v260 = vsel %vm228, 1, 0
    %v261 = vsel %vm229, 1, 0
    %v262 = vsel %vm230, 1, 0
    %v263 = vsel %vm231, 1, 0
    %v264 = vsel %vm232, 1, 0
    %v265 = vcvt.s32.f32 %v233
    %v266 = vcvt.s32.f32 %v234
    %v267 = vcvt.s32.f32 %v235
    %v268 = vcvt.s32.f32 %v236
    %v269 = vcvt.s32.f32 %v237
    %v270 = vcvt.s32.f32 %v238
    %v271 = vcvt.s32.f32 %v239
    %v272 = vcvt.s32.f32 %v240
    %v273 = vcvt.s32.f32 %v241
    %v274 = vcvt.s32.f32 %v242
    %v275 = vcvt.s32.f32 %v243
    %v276 = vcvt.s32.f32 %v244
    %v277 = vcvt.s32.f32 %v245
    %v278 = vcvt.s32.f32 %v246
    %v279 = vcvt.s32.f32 %v247
    %v280 = vcvt.s32.f32 %v248
    %v281 = vcvt.s32.f32 %v249
    %v282 = vcvt.s32.f32 %v250
    %v283 = vcvt.s32.f32 %v251
    %v284 = vcvt.s32.f32 %v252
    %v285 = vcvt.s32.f32 %v253
    %v286 = vcvt.s32.f32 %v254
    %v287 = vcvt.s32.f32 %v255
    %v288 = vcvt.s32.f32 %v256
    %v289 = vcvt.s32.f32 %v257
    %v290 = vcvt.s32.f32 %v258
    %v291 = vcvt.s32.f32 %v259
    %v292 = vcvt.s32.f32 %v260
    %v293 = vcvt.s32.f32 %v261
    %v294 = vcvt.s32.f32 %v262
    %v295 = vcvt.s32.f32 %v263
    %v296 = vcvt.s32.f32 %v264
    %v297 = vpack.c.bf16 %v267, %v265
    %v298 = vpack.c.bf16 %v268, %v266
    %v299 = vpack.c.bf16 %v271, %v269
    %v300 = vpack.c.bf16 %v272, %v270
    %v301 = vpack.c.bf16 %v275, %v273
    %v302 = vpack.c.bf16 %v276, %v274
    %v303 = vpack.c.bf16 %v279, %v277
    %v304 = vpack.c.bf16 %v280, %v278
    %v305 = vpack.c.bf16 %v283, %v281
    %v306 = vpack.c.bf16 %v284, %v282
    %v307 = vpack.c.bf16 %v287, %v285
    %v308 = vpack.c.bf16 %v288, %v286
    %v309 = vpack.c.bf16 %v291, %v289
    %v310 = vpack.c.bf16 %v292, %v290
    %v311 = vpack.c.bf16 %v295, %v293
    %v312 = vpack.c.bf16 %v296, %v294
    %v313 = vsub.bf16 %v169, %v297
    %v314 = vsub.bf16 %v170, %v298
    %v315 = vsub.bf16 %v171, %v299
    %v316 = vsub.bf16 %v172, %v300
    %v317 = vsub.bf16 %v173, %v301
    %v318 = vsub.bf16 %v174, %v302
    %v319 = vsub.bf16 %v175, %v303
    %v320 = vsub.bf16 %v176, %v304
    %v321 = vsub.bf16 %v177, %v305
    %v322 = vsub.bf16 %v178, %v306
    %v323 = vsub.bf16 %v179, %v307
    %v324 = vsub.bf16 %v180, %v308
    %v325 = vsub.bf16 %v181, %v309
    %v326 = vsub.bf16 %v182, %v310
    %v327 = vsub.bf16 %v183, %v311
    %v328 = vsub.bf16 %v184, %v312
    %v329 = vld [vmem:[#allocation5] sm:$0xf]
    %v330 = vld [vmem:[#allocation5 + $0x4] sm:$0xf]
    %v331 = vld [vmem:[#allocation5 + $0x8] sm:$0xf]
    %v332 = vld [vmem:[#allocation5 + $0xc] sm:$0xf]
    %v333 = vld [vmem:[#allocation5 + $0x10] sm:$0xf]
    %v334 = vld [vmem:[#allocation5 + $0x14] sm:$0xf]
    %v335 = vld [vmem:[#allocation5 + $0x18] sm:$0xf]
    %v336 = vld [vmem:[#allocation5 + $0x1c] sm:$0xf]
    %v337 = vld [vmem:[#allocation5 + $0x20] sm:$0xf]
    %v338 = vld [vmem:[#allocation5 + $0x24] sm:$0xf]
    %v339 = vld [vmem:[#allocation5 + $0x28] sm:$0xf]
    %v340 = vld [vmem:[#allocation5 + $0x2c] sm:$0xf]
    %v341 = vld [vmem:[#allocation5 + $0x30] sm:$0xf]
    %v342 = vld [vmem:[#allocation5 + $0x34] sm:$0xf]
    %v343 = vld [vmem:[#allocation5 + $0x38] sm:$0xf]
    %v344 = vld [vmem:[#allocation5 + $0x3c] sm:$0xf]
    %v361 = vunpack.c.l.b16 %v329
    %v362 = vunpack.c.l.b16 %v330
    %v363 = vunpack.c.l.b16 %v331
    %v364 = vunpack.c.l.b16 %v332
    %v365 = vunpack.c.l.b16 %v333
    %v366 = vunpack.c.l.b16 %v334
    %v367 = vunpack.c.l.b16 %v335
    %v368 = vunpack.c.l.b16 %v336
    %v369 = vunpack.c.l.b16 %v337
    %v370 = vunpack.c.l.b16 %v338
    %v371 = vunpack.c.l.b16 %v339
    %v372 = vunpack.c.l.b16 %v340
    %v373 = vunpack.c.l.b16 %v341
    %v374 = vunpack.c.l.b16 %v342
    %v375 = vunpack.c.l.b16 %v343
    %v376 = vunpack.c.l.b16 %v344
    %v377 = vpack.c.b16 %v362, %v361
    %v378 = vpack.c.b16 %v364, %v363
    %v379 = vpack.c.b16 %v366, %v365
    %v380 = vpack.c.b16 %v368, %v367
    %v381 = vpack.c.b16 %v370, %v369
    %v382 = vpack.c.b16 %v372, %v371
    %v383 = vpack.c.b16 %v374, %v373
    %v384 = vpack.c.b16 %v376, %v375
    %393 = vmatprep.subr.bf16.mxu0 %v314
    %394 = vmatpush1.bf16.msra.mxu0 %v313
    %395 = vmatprep.subr.bf16.mxu0 %v316
    %396 = vmatpush1.bf16.msra.mxu0 %v315
    %397 = vmatprep.subr.bf16.mxu0 %v318
    %398 = vmatpush1.bf16.msra.mxu0 %v317
    %399 = vmatprep.subr.bf16.mxu0 %v320
    %400 = vmatpush1.bf16.msra.mxu0 %v319
    %401 = vmatprep.subr.bf16.mxu0 %v322
    %402 = vmatpush1.bf16.msra.mxu0 %v321
    %403 = vmatprep.subr.bf16.mxu0 %v324
    %404 = vmatpush1.bf16.msra.mxu0 %v323
    %405 = vmatprep.subr.bf16.mxu0 %v326
    %406 = vmatpush1.bf16.msra.mxu0 %v325
    %407 = vmatprep.subr.bf16.mxu0 %v328
    %408 = vmatpush1.bf16.msra.mxu0 %v327
    %409 = vmatprep.subr.bf16.mxu0 0
    %410 = vmatpush1.bf16.msra.mxu0 0
    %411 = vmatprep.subr.bf16.mxu0 0
    %412 = vmatpush1.bf16.msra.mxu0 0
    %413 = vmatprep.subr.bf16.mxu0 0
    %414 = vmatpush1.bf16.msra.mxu0 0
    %415 = vmatprep.subr.bf16.mxu0 0
    %416 = vmatpush1.bf16.msra.mxu0 0
    %417 = vmatprep.subr.bf16.mxu0 0
    %418 = vmatpush1.bf16.msra.mxu0 0
    %419 = vmatprep.subr.bf16.mxu0 0
    %420 = vmatpush1.bf16.msra.mxu0 0
    %421 = vmatprep.subr.bf16.mxu0 0
    %422 = vmatpush1.bf16.msra.mxu0 0
    %423 = vmatprep.subr.bf16.mxu0 0
    %424 = vmatpush1.bf16.msra.mxu0 0
    %425 = vmatprep.mubr.bf16.mxu0 0
    %426 = vmatmul.mubr.bf16.gmra.mrb[0].mxu0 %v377
    %v427 = vpop.f32.mrb[0].mxu0
    %v428 = vadd.f32 0.0, %v427
    %v429 = vpop.f32.mrb[0].mxu0
    %v430 = vadd.f32 0.0, %v429
    %v431 = vpop.f32.mrb[0].mxu0
    %v432 = vadd.f32 0.0, %v431
    %v433 = vpop.f32.mrb[0].mxu0
    %v434 = vadd.f32 0.0, %v433
    %435 = vmatprep.mubr.bf16.mxu0 0
    %436 = vmatmul.mubr.bf16.gmra.mrb[0].mxu0 %v378
    %v437 = vpop.f32.mrb[0].mxu0
    %v438 = vadd.f32 0.0, %v437
    %v439 = vpop.f32.mrb[0].mxu0
    %v440 = vadd.f32 0.0, %v439
    %v441 = vpop.f32.mrb[0].mxu0
    %v442 = vadd.f32 0.0, %v441
    %v443 = vpop.f32.mrb[0].mxu0
    %v444 = vadd.f32 0.0, %v443
    %445 = vmatprep.mubr.bf16.mxu0 0
    %446 = vmatmul.mubr.bf16.gmra.mrb[0].mxu0 %v379
    %v447 = vpop.f32.mrb[0].mxu0
    %v448 = vadd.f32 0.0, %v447
    %v449 = vpop.f32.mrb[0].mxu0
    %v450 = vadd.f32 0.0, %v449
    %v451 = vpop.f32.mrb[0].mxu0
    %v452 = vadd.f32 0.0, %v451
    %v453 = vpop.f32.mrb[0].mxu0
    %v454 = vadd.f32 0.0, %v453
    %455 = vmatprep.mubr.bf16.mxu0 0
    %456 = vmatmul.mubr.bf16.gmra.mrb[0].mxu0 %v380
    %v457 = vpop.f32.mrb[0].mxu0
    %v458 = vadd.f32 0.0, %v457
    %v459 = vpop.f32.mrb[0].mxu0
    %v460 = vadd.f32 0.0, %v459
    %v461 = vpop.f32.mrb[0].mxu0
    %v462 = vadd.f32 0.0, %v461
    %v463 = vpop.f32.mrb[0].mxu0
    %v464 = vadd.f32 0.0, %v463
    %465 = vmatprep.mubr.bf16.mxu0 0
    %466 = vmatmul.mubr.bf16.gmra.mrb[0].mxu0 %v381
    %v467 = vpop.f32.mrb[0].mxu0
    %v468 = vadd.f32 0.0, %v467
    %v469 = vpop.f32.mrb[0].mxu0
    %v470 = vadd.f32 0.0, %v469
    %v471 = vpop.f32.mrb[0].mxu0
    %v472 = vadd.f32 0.0, %v471
    %v473 = vpop.f32.mrb[0].mxu0
    %v474 = vadd.f32 0.0, %v473
    %475 = vmatprep.mubr.bf16.mxu0 0
    %476 = vmatmul.mubr.bf16.gmra.mrb[0].mxu0 %v382
    %v477 = vpop.f32.mrb[0].mxu0
    %v478 = vadd.f32 0.0, %v477
    %v479 = vpop.f32.mrb[0].mxu0
    %v480 = vadd.f32 0.0, %v479
    %v481 = vpop.f32.mrb[0].mxu0
    %v482 = vadd.f32 0.0, %v481
    %v483 = vpop.f32.mrb[0].mxu0
    %v484 = vadd.f32 0.0, %v483
    %485 = vmatprep.mubr.bf16.mxu0 0
    %486 = vmatmul.mubr.bf16.gmra.mrb[0].mxu0 %v383
    %v487 = vpop.f32.mrb[0].mxu0
    %v488 = vadd.f32 0.0, %v487
    %v489 = vpop.f32.mrb[0].mxu0
    %v490 = vadd.f32 0.0, %v489
    %v491 = vpop.f32.mrb[0].mxu0
    %v492 = vadd.f32 0.0, %v491
    %v493 = vpop.f32.mrb[0].mxu0
    %v494 = vadd.f32 0.0, %v493
    %495 = vmatprep.mubr.bf16.mxu0 0
    %496 = vmatmul.mubr.bf16.gmra.mrb[0].mxu0 %v384
    %v497 = vpop.f32.mrb[0].mxu0
    %v498 = vadd.f32 0.0, %v497
    %v499 = vpop.f32.mrb[0].mxu0
    %v500 = vadd.f32 0.0, %v499
    %v501 = vpop.f32.mrb[0].mxu0
    %v502 = vadd.f32 0.0, %v501
    %v503 = vpop.f32.mrb[0].mxu0
    %v504 = vadd.f32 0.0, %v503
    %505 = vdwg.mxu0
    %v506 = vmul.f32 %v428, %v430
    %v507 = vmul.f32 %v432, %v434
    %v508 = vmul.f32 %v438, %v440
    %v509 = vmul.f32 %v442, %v444
    %v510 = vmul.f32 %v448, %v450
    %v511 = vmul.f32 %v452, %v454
    %v512 = vmul.f32 %v458, %v460
    %v513 = vmul.f32 %v462, %v464
    %v514 = vmul.f32 %v468, %v470
    %v515 = vmul.f32 %v472, %v474
    %v516 = vmul.f32 %v478, %v480
    %v517 = vmul.f32 %v482, %v484
    %v518 = vmul.f32 %v488, %v490
    %v519 = vmul.f32 %v492, %v494
    %v520 = vmul.f32 %v498, %v500
    %v521 = vmul.f32 %v502, %v504
    %v522 = vadd.f32 %v506, %v507
    %v523 = vadd.f32 %v522, %v508
    %v524 = vadd.f32 %v523, %v509
    %v525 = vadd.f32 %v524, %v510
    %v526 = vadd.f32 %v525, %v511
    %v527 = vadd.f32 %v526, %v512
    %v528 = vadd.f32 %v527, %v513
    %v529 = vadd.f32 %v528, %v514
    %v530 = vadd.f32 %v529, %v515
    %v531 = vadd.f32 %v530, %v516
    %v532 = vadd.f32 %v531, %v517
    %v533 = vadd.f32 %v532, %v518
    %v534 = vadd.f32 %v533, %v519
    %v535 = vadd.f32 %v534, %v520
    %v536 = vadd.f32 %v535, %v521
    %v537 = vrot.slane %v536, 4
    %v538 = vadd.f32 %v536, %v537
    %v539 = vrot.slane %v538, 2
    %v540 = vadd.f32 %v538, %v539
    %v541 = vrot.slane %v540, 1
    %v542 = vadd.f32 %v540, %v541
    %v543 = vxor.u32 %v542, 2147483648
    %v544 = vmul.f32 %v543, 1.442695
    %v545 = vpow.pop %v544
    %v546 = vadd.f32 %v545, 1.0
    %v547 = vrcp.pop %v546
    %v548 = vmul.f32 1.0, %v547
    %549 = vst [vmem:[#allocation7] sm:$0x1] %v548
    // Predicated region
    $region18: #{tpu_custom_call.1} parent=1 // pred_check
      _
    $region19: #{tpu_custom_call.1} parent=1 // pred_check_branch
      %551 = sbr.rel (0) target = $region21
    $region20: #{tpu_custom_call.1} parent=1 // pred_region
      %s553 = ssub.s32 16, 16
      %554 = vsyncadd [#allocation4], %s553
      %s556 = sshll.u32 [#allocation7], 4
      %s557 = int_to_ptr.vmem [resolvable:$true] %s556
      %559 = dma.vmem_to_hbm [thread:$0]  %s557, 16, %s2, [#allocation4]
    $region21: #{tpu_custom_call.1} parent=1 // pred_fallthru
      _
    // Predicated region
    $region22: #{tpu_custom_call.1} parent=1 // pred_check
      _
    $region23: #{tpu_custom_call.1} parent=1 // pred_check_branch
      %561 = sbr.rel (0) target = $region25
    $region24: #{tpu_custom_call.1} parent=1 // pred_region
      %562 = dma.done [#allocation4], 16
    $region25: #{tpu_custom_call.1} parent=1 // pred_fallthru
      _
    %563 = vsyncpa [#allocation3], 1
    %564 = vsyncpa [#allocation6], 1
    %565 = vsyncpa [#allocation4], 1

// kernel: tpu_custom_call.1
$region0: #{tpu_custom_call.1}
  #allocation0 [shape = 'u32[]', space=smem, size = 0x4, offset = 0x4, fixed_abs, tag = 'smem constant byte address 0x4 - core index']
  #allocation1 [shape = 'u32[144,128]{1,0:T(1,128)}', space=vmem, size = 0x12000, scoped, tag = 'internal scratch']
  %s0 = inlined_call_operand.hbm [shape: s32[1,2,256], index: 0, kind: input, shape index: {}]
  %s1 = inlined_call_operand.hbm [shape: bf16[128,128], index: 1, kind: input, shape index: {}]
  %s2 = inlined_call_operand.hbm [shape: f32[1,1,128], index: 2, kind: output, shape index: {}]
  %s3 = sld [smem:[#allocation0]]
  $region26: #{tpu_custom_call.1} parent=0
    _
  %s5 = ssub.s32 1, %s3
  %s6 = scalar_select 0, %s5, %s3
  $region1: #{tpu_custom_call.1} parent=0
    #allocation2 [shape = 'u8[2048]{0}', space=vmem, size = 0x800, scoped, tag = 'input window, operand 0, single buffered']
    #allocation3 [shape = 's32[1]{0}', space=sflag, size = 0x4, scoped, tag = 'scoped memory for tpu_custom_call.1']
    #allocation4 [shape = 's32[1]{0}', space=sflag, size = 0x4, scoped, tag = 'scoped memory for tpu_custom_call.1']
    #allocation5 [shape = 'u8[32768]{0}', space=vmem, size = 0x8000, scoped, tag = 'input window, operand 1, single buffered']
    #allocation6 [shape = 's32[1]{0}', space=sflag, size = 0x4, scoped, tag = 'scoped memory for tpu_custom_call.1']
    #allocation7 [shape = 'u8[512]{0}', space=vmem, size = 0x400, scoped, tag = 'output window, operand 0, single buffered']
    %7 = vsyncpa [#allocation3], 0
    %8 = vsyncpa [#allocation6], 0
    %9 = vsyncpa [#allocation4], 0
    // Predicated region
    $region2: #{tpu_custom_call.1} parent=1 // pred_check
      _
    $region3: #{tpu_custom_call.1} parent=1 // pred_check_branch
      %11 = sbr.rel (0) target = $region5
    $region4: #{tpu_custom_call.1} parent=1 // pred_region
      %s13 = ssub.s32 64, 64
      %14 = vsyncadd [#allocation3], %s13
      %s16 = sshll.u32 [#allocation2], 4
      %s17 = int_to_ptr.vmem [resolvable:$true] %s16
      %19 = dma.hbm_to_vmem [thread:$0]  %s0, 64, %s17, [#allocation3]
    $region5: #{tpu_custom_call.1} parent=1 // pred_fallthru
      _
    // Predicated region
    $region6: #{tpu_custom_call.1} parent=1 // pred_check
      _
    $region7: #{tpu_custom_call.1} parent=1 // pred_check_branch
      %21 = sbr.rel (0) target = $region9
    $region8: #{tpu_custom_call.1} parent=1 // pred_region
      %s23 = ssub.s32 1024, 1024
      %24 = vsyncadd [#allocation6], %s23
      %s25 = sshll.u32 [#allocation5], 4
      %s26 = int_to_ptr.vmem [resolvable:$true] %s25
      %31 = dma.hbm_to_vmem [thread:$0]  %s1, 1024, %s26, [#allocation6], 64, 64, 4
    $region9: #{tpu_custom_call.1} parent=1 // pred_fallthru
      _
    // Predicated region
    $region10: #{tpu_custom_call.1} parent=1 // pred_check
      _
    $region11: #{tpu_custom_call.1} parent=1 // pred_check_branch
      %33 = sbr.rel (0) target = $region13
    $region12: #{tpu_custom_call.1} parent=1 // pred_region
      %34 = dma.done [#allocation3], 64
    $region13: #{tpu_custom_call.1} parent=1 // pred_fallthru
      _
    // Predicated region
    $region14: #{tpu_custom_call.1} parent=1 // pred_check
      _
    $region15: #{tpu_custom_call.1} parent=1 // pred_check_branch
      %36 = sbr.rel (0) target = $region17
    $region16: #{tpu_custom_call.1} parent=1 // pred_region
      %37 = dma.done [#allocation6], 1024
    $region17: #{tpu_custom_call.1} parent=1 // pred_fallthru
      _
    %v39 = vlaneseq
    %v40 = vshrl.u32 %v39, 7
    %v41 = vadd.s32 %v40, 8
    %v42 = vadd.s32 %v40, 16
    %v43 = vadd.s32 %v40, 24
    %v44 = vadd.s32 %v40, 32
    %v45 = vadd.s32 %v40, 40
    %v46 = vadd.s32 %v40, 48
    %v47 = vadd.s32 %v40, 56
    %v48 = vadd.s32 %v40, 64
    %v49 = vadd.s32 %v40, 72
    %v50 = vadd.s32 %v40, 80
    %v51 = vadd.s32 %v40, 88
    %v52 = vadd.s32 %v40, 96
    %v53 = vadd.s32 %v40, 104
    %v54 = vadd.s32 %v40, 112
    %v55 = vadd.s32 %v40, 120
    %v56 = vld [vmem:[#allocation2] sm:$0xf]
    %v57 = vlaneseq
    %v58 = vshrl.u32 %v57, 7
    %v59 = vsub.s32 0, %v58
    %v60 = vrot.slane %v56, %v59
    %v61 = vlaneseq
    %v62 = vshrl.u32 %v61, 7
    %v63 = vsub.s32 2, %v62
    %v64 = vrot.slane %v56, %v63
    %v65 = vlaneseq
    %v66 = vshrl.u32 %v65, 7
    %v67 = vsub.s32 0, %v66
    %v68 = vrot.slane %v60, %v67
    %v69 = vlaneseq
    %v70 = vshrl.u32 %v69, 7
    %v71 = vsub.s32 0, %v70
    %v72 = vrot.slane %v64, %v71
    %vm73 = vcmp.eq.s32.totalorder %v68, %v40
    %vm74 = vcmp.eq.s32.totalorder %v72, %v40
    %vm75 = vcmp.eq.s32.totalorder %v68, %v41
    %vm76 = vcmp.eq.s32.totalorder %v72, %v41
    %vm77 = vcmp.eq.s32.totalorder %v68, %v42
    %vm78 = vcmp.eq.s32.totalorder %v72, %v42
    %vm79 = vcmp.eq.s32.totalorder %v68, %v43
    %vm80 = vcmp.eq.s32.totalorder %v72, %v43
    %vm81 = vcmp.eq.s32.totalorder %v68, %v44
    %vm82 = vcmp.eq.s32.totalorder %v72, %v44
    %vm83 = vcmp.eq.s32.totalorder %v68, %v45
    %vm84 = vcmp.eq.s32.totalorder %v72, %v45
    %vm85 = vcmp.eq.s32.totalorder %v68, %v46
    %vm86 = vcmp.eq.s32.totalorder %v72, %v46
    %vm87 = vcmp.eq.s32.totalorder %v68, %v47
    %vm88 = vcmp.eq.s32.totalorder %v72, %v47
    %vm89 = vcmp.eq.s32.totalorder %v68, %v48
    %vm90 = vcmp.eq.s32.totalorder %v72, %v48
    %vm91 = vcmp.eq.s32.totalorder %v68, %v49
    %vm92 = vcmp.eq.s32.totalorder %v72, %v49
    %vm93 = vcmp.eq.s32.totalorder %v68, %v50
    %vm94 = vcmp.eq.s32.totalorder %v72, %v50
    %vm95 = vcmp.eq.s32.totalorder %v68, %v51
    %vm96 = vcmp.eq.s32.totalorder %v72, %v51
    %vm97 = vcmp.eq.s32.totalorder %v68, %v52
    %vm98 = vcmp.eq.s32.totalorder %v72, %v52
    %vm99 = vcmp.eq.s32.totalorder %v68, %v53
    %vm100 = vcmp.eq.s32.totalorder %v72, %v53
    %vm101 = vcmp.eq.s32.totalorder %v68, %v54
    %vm102 = vcmp.eq.s32.totalorder %v72, %v54
    %vm103 = vcmp.eq.s32.totalorder %v68, %v55
    %vm104 = vcmp.eq.s32.totalorder %v72, %v55
    %v105 = vsel %vm73, 1, 0
    %v106 = vsel %vm74, 1, 0
    %v107 = vsel %vm75, 1, 0
    %v108 = vsel %vm76, 1, 0
    %v109 = vsel %vm77, 1, 0
    %v110 = vsel %vm78, 1, 0
    %v111 = vsel %vm79, 1, 0
    %v112 = vsel %vm80, 1, 0
    %v113 = vsel %vm81, 1, 0
    %v114 = vsel %vm82, 1, 0
    %v115 = vsel %vm83, 1, 0
    %v116 = vsel %vm84, 1, 0
    %v117 = vsel %vm85, 1, 0
    %v118 = vsel %vm86, 1, 0
    %v119 = vsel %vm87, 1, 0
    %v120 = vsel %vm88, 1, 0
    %v121 = vsel %vm89, 1, 0
    %v122 = vsel %vm90, 1, 0
    %v123 = vsel %vm91, 1, 0
    %v124 = vsel %vm92, 1, 0
    %v125 = vsel %vm93, 1, 0
    %v126 = vsel %vm94, 1, 0
    %v127 = vsel %vm95, 1, 0
    %v128 = vsel %vm96, 1, 0
    %v129 = vsel %vm97, 1, 0
    %v130 = vsel %vm98, 1, 0
    %v131 = vsel %vm99, 1, 0
    %v132 = vsel %vm100, 1, 0
    %v133 = vsel %vm101, 1, 0
    %v134 = vsel %vm102, 1, 0
    %v135 = vsel %vm103, 1, 0
    %v136 = vsel %vm104, 1, 0
    %v137 = vcvt.s32.f32 %v105
    %v138 = vcvt.s32.f32 %v106
    %v139 = vcvt.s32.f32 %v107
    %v140 = vcvt.s32.f32 %v108
    %v141 = vcvt.s32.f32 %v109
    %v142 = vcvt.s32.f32 %v110
    %v143 = vcvt.s32.f32 %v111
    %v144 = vcvt.s32.f32 %v112
    %v145 = vcvt.s32.f32 %v113
    %v146 = vcvt.s32.f32 %v114
    %v147 = vcvt.s32.f32 %v115
    %v148 = vcvt.s32.f32 %v116
    %v149 = vcvt.s32.f32 %v117
    %v150 = vcvt.s32.f32 %v118
    %v151 = vcvt.s32.f32 %v119
    %v152 = vcvt.s32.f32 %v120
    %v153 = vcvt.s32.f32 %v121
    %v154 = vcvt.s32.f32 %v122
    %v155 = vcvt.s32.f32 %v123
    %v156 = vcvt.s32.f32 %v124
    %v157 = vcvt.s32.f32 %v125
    %v158 = vcvt.s32.f32 %v126
    %v159 = vcvt.s32.f32 %v127
    %v160 = vcvt.s32.f32 %v128
    %v161 = vcvt.s32.f32 %v129
    %v162 = vcvt.s32.f32 %v130
    %v163 = vcvt.s32.f32 %v131
    %v164 = vcvt.s32.f32 %v132
    %v165 = vcvt.s32.f32 %v133
    %v166 = vcvt.s32.f32 %v134
    %v167 = vcvt.s32.f32 %v135
    %v168 = vcvt.s32.f32 %v136
    %v169 = vpack.c.bf16 %v139, %v137
    %v170 = vpack.c.bf16 %v140, %v138
    %v171 = vpack.c.bf16 %v143, %v141
    %v172 = vpack.c.bf16 %v144, %v142
    %v173 = vpack.c.bf16 %v147, %v145
    %v174 = vpack.c.bf16 %v148, %v146
    %v175 = vpack.c.bf16 %v151, %v149
    %v176 = vpack.c.bf16 %v152, %v150
    %v177 = vpack.c.bf16 %v155, %v153
    %v178 = vpack.c.bf16 %v156, %v154
    %v179 = vpack.c.bf16 %v159, %v157
    %v180 = vpack.c.bf16 %v160, %v158
    %v181 = vpack.c.bf16 %v163, %v161
    %v182 = vpack.c.bf16 %v164, %v162
    %v183 = vpack.c.bf16 %v167, %v165
    %v184 = vpack.c.bf16 %v168, %v166
    %v185 = vlaneseq
    %v186 = vshrl.u32 %v185, 7
    %v187 = vsub.s32 1, %v186
    %v188 = vrot.slane %v56, %v187
    %v189 = vlaneseq
    %v190 = vshrl.u32 %v189, 7
    %v191 = vsub.s32 3, %v190
    %v192 = vrot.slane %v56, %v191
    %v193 = vlaneseq
    %v194 = vshrl.u32 %v193, 7
    %v195 = vsub.s32 1, %v194
    %v196 = vrot.slane %v188, %v195
    %v197 = vlaneseq
    %v198 = vshrl.u32 %v197, 7
    %v199 = vsub.s32 1, %v198
    %v200 = vrot.slane %v192, %v199
    %vm201 = vcmp.eq.s32.totalorder %v196, %v40
    %vm202 = vcmp.eq.s32.totalorder %v200, %v40
    %vm203 = vcmp.eq.s32.totalorder %v196, %v41
    %vm204 = vcmp.eq.s32.totalorder %v200, %v41
    %vm205 = vcmp.eq.s32.totalorder %v196, %v42
    %vm206 = vcmp.eq.s32.totalorder %v200, %v42
    %vm207 = vcmp.eq.s32.totalorder %v196, %v43
    %vm208 = vcmp.eq.s32.totalorder %v200, %v43
    %vm209 = vcmp.eq.s32.totalorder %v196, %v44
    %vm210 = vcmp.eq.s32.totalorder %v200, %v44
    %vm211 = vcmp.eq.s32.totalorder %v196, %v45
    %vm212 = vcmp.eq.s32.totalorder %v200, %v45
    %vm213 = vcmp.eq.s32.totalorder %v196, %v46
    %vm214 = vcmp.eq.s32.totalorder %v200, %v46
    %vm215 = vcmp.eq.s32.totalorder %v196, %v47
    %vm216 = vcmp.eq.s32.totalorder %v200, %v47
    %vm217 = vcmp.eq.s32.totalorder %v196, %v48
    %vm218 = vcmp.eq.s32.totalorder %v200, %v48
    %vm219 = vcmp.eq.s32.totalorder %v196, %v49
    %vm220 = vcmp.eq.s32.totalorder %v200, %v49
    %vm221 = vcmp.eq.s32.totalorder %v196, %v50
    %vm222 = vcmp.eq.s32.totalorder %v200, %v50
    %vm223 = vcmp.eq.s32.totalorder %v196, %v51
    %vm224 = vcmp.eq.s32.totalorder %v200, %v51
    %vm225 = vcmp.eq.s32.totalorder %v196, %v52
    %vm226 = vcmp.eq.s32.totalorder %v200, %v52
    %vm227 = vcmp.eq.s32.totalorder %v196, %v53
    %vm228 = vcmp.eq.s32.totalorder %v200, %v53
    %vm229 = vcmp.eq.s32.totalorder %v196, %v54
    %vm230 = vcmp.eq.s32.totalorder %v200, %v54
    %vm231 = vcmp.eq.s32.totalorder %v196, %v55
    %vm232 = vcmp.eq.s32.totalorder %v200, %v55
    %v233 = vsel %vm201, 1, 0
    %v234 = vsel %vm202, 1, 0
    %v235 = vsel %vm203, 1, 0
    %v236 = vsel %vm204, 1, 0
    %v237 = vsel %vm205, 1, 0
    %v238 = vsel %vm206, 1, 0
    %v239 = vsel %vm207, 1, 0
    %v240 = vsel %vm208, 1, 0
    %v241 = vsel %vm209, 1, 0
    %v242 = vsel %vm210, 1, 0
    %v243 = vsel %vm211, 1, 0
    %v244 = vsel %vm212, 1, 0
    %v245 = vsel %vm213, 1, 0
    %v246 = vsel %vm214, 1, 0
    %v247 = vsel %vm215, 1, 0
    %v248 = vsel %vm216, 1, 0
    %v249 = vsel %vm217, 1, 0
    %v250 = vsel %vm218, 1, 0
    %v251 = vsel %vm219, 1, 0
    %v252 = vsel %vm220, 1, 0
    %v253 = vsel %vm221, 1, 0
    %v254 = vsel %vm222, 1, 0
    %v255 = vsel %vm223, 1, 0
    %v256 = vsel %vm224, 1, 0
    %v257 = vsel %vm225, 1, 0
    %v258 = vsel %vm226, 1, 0
    %v259 = vsel %vm227, 1, 0
    %v260 = vsel %vm228, 1, 0
    %v261 = vsel %vm229, 1, 0
    %v262 = vsel %vm230, 1, 0
    %v263 = vsel %vm231, 1, 0
    %v264 = vsel %vm232, 1, 0
    %v265 = vcvt.s32.f32 %v233
    %v266 = vcvt.s32.f32 %v234
    %v267 = vcvt.s32.f32 %v235
    %v268 = vcvt.s32.f32 %v236
    %v269 = vcvt.s32.f32 %v237
    %v270 = vcvt.s32.f32 %v238
    %v271 = vcvt.s32.f32 %v239
    %v272 = vcvt.s32.f32 %v240
    %v273 = vcvt.s32.f32 %v241
    %v274 = vcvt.s32.f32 %v242
    %v275 = vcvt.s32.f32 %v243
    %v276 = vcvt.s32.f32 %v244
    %v277 = vcvt.s32.f32 %v245
    %v278 = vcvt.s32.f32 %v246
    %v279 = vcvt.s32.f32 %v247
    %v280 = vcvt.s32.f32 %v248
    %v281 = vcvt.s32.f32 %v249
    %v282 = vcvt.s32.f32 %v250
    %v283 = vcvt.s32.f32 %v251
    %v284 = vcvt.s32.f32 %v252
    %v285 = vcvt.s32.f32 %v253
    %v286 = vcvt.s32.f32 %v254
    %v287 = vcvt.s32.f32 %v255
    %v288 = vcvt.s32.f32 %v256
    %v289 = vcvt.s32.f32 %v257
    %v290 = vcvt.s32.f32 %v258
    %v291 = vcvt.s32.f32 %v259
    %v292 = vcvt.s32.f32 %v260
    %v293 = vcvt.s32.f32 %v261
    %v294 = vcvt.s32.f32 %v262
    %v295 = vcvt.s32.f32 %v263
    %v296 = vcvt.s32.f32 %v264
    %v297 = vpack.c.bf16 %v267, %v265
    %v298 = vpack.c.bf16 %v268, %v266
    %v299 = vpack.c.bf16 %v271, %v269
    %v300 = vpack.c.bf16 %v272, %v270
    %v301 = vpack.c.bf16 %v275, %v273
    %v302 = vpack.c.bf16 %v276, %v274
    %v303 = vpack.c.bf16 %v279, %v277
    %v304 = vpack.c.bf16 %v280, %v278
    %v305 = vpack.c.bf16 %v283, %v281
    %v306 = vpack.c.bf16 %v284, %v282
    %v307 = vpack.c.bf16 %v287, %v285
    %v308 = vpack.c.bf16 %v288, %v286
    %v309 = vpack.c.bf16 %v291, %v289
    %v310 = vpack.c.bf16 %v292, %v290
    %v311 = vpack.c.bf16 %v295, %v293
    %v312 = vpack.c.bf16 %v296, %v294
    %v313 = vsub.bf16 %v169, %v297
    %v314 = vsub.bf16 %v170, %v298
    %v315 = vsub.bf16 %v171, %v299
    %v316 = vsub.bf16 %v172, %v300
    %v317 = vsub.bf16 %v173, %v301
    %v318 = vsub.bf16 %v174, %v302
    %v319 = vsub.bf16 %v175, %v303
    %v320 = vsub.bf16 %v176, %v304
    %v321 = vsub.bf16 %v177, %v305
    %v322 = vsub.bf16 %v178, %v306
    %v323 = vsub.bf16 %v179, %v307
    %v324 = vsub.bf16 %v180, %v308
    %v325 = vsub.bf16 %v181, %v309
    %v326 = vsub.bf16 %v182, %v310
    %v327 = vsub.bf16 %v183, %v311
    %v328 = vsub.bf16 %v184, %v312
    %v329 = vld [vmem:[#allocation5] sm:$0xf]
    %v330 = vld [vmem:[#allocation5 + $0x4] sm:$0xf]
    %v331 = vld [vmem:[#allocation5 + $0x8] sm:$0xf]
    %v332 = vld [vmem:[#allocation5 + $0xc] sm:$0xf]
    %v333 = vld [vmem:[#allocation5 + $0x10] sm:$0xf]
    %v334 = vld [vmem:[#allocation5 + $0x14] sm:$0xf]
    %v335 = vld [vmem:[#allocation5 + $0x18] sm:$0xf]
    %v336 = vld [vmem:[#allocation5 + $0x1c] sm:$0xf]
    %v337 = vld [vmem:[#allocation5 + $0x20] sm:$0xf]
    %v338 = vld [vmem:[#allocation5 + $0x24] sm:$0xf]
    %v339 = vld [vmem:[#allocation5 + $0x28] sm:$0xf]
    %v340 = vld [vmem:[#allocation5 + $0x2c] sm:$0xf]
    %v341 = vld [vmem:[#allocation5 + $0x30] sm:$0xf]
    %v342 = vld [vmem:[#allocation5 + $0x34] sm:$0xf]
    %v343 = vld [vmem:[#allocation5 + $0x38] sm:$0xf]
    %v344 = vld [vmem:[#allocation5 + $0x3c] sm:$0xf]
    %v361 = vunpack.c.l.b16 %v329
    %v362 = vunpack.c.l.b16 %v330
    %v363 = vunpack.c.l.b16 %v331
    %v364 = vunpack.c.l.b16 %v332
    %v365 = vunpack.c.l.b16 %v333
    %v366 = vunpack.c.l.b16 %v334
    %v367 = vunpack.c.l.b16 %v335
    %v368 = vunpack.c.l.b16 %v336
    %v369 = vunpack.c.l.b16 %v337
    %v370 = vunpack.c.l.b16 %v338
    %v371 = vunpack.c.l.b16 %v339
    %v372 = vunpack.c.l.b16 %v340
    %v373 = vunpack.c.l.b16 %v341
    %v374 = vunpack.c.l.b16 %v342
    %v375 = vunpack.c.l.b16 %v343
    %v376 = vunpack.c.l.b16 %v344
    %v377 = vpack.c.b16 %v362, %v361
    %v378 = vpack.c.b16 %v364, %v363
    %v379 = vpack.c.b16 %v366, %v365
    %v380 = vpack.c.b16 %v368, %v367
    %v381 = vpack.c.b16 %v370, %v369
    %v382 = vpack.c.b16 %v372, %v371
    %v383 = vpack.c.b16 %v374, %v373
    %v384 = vpack.c.b16 %v376, %v375
    %393 = vmatprep.subr.bf16.mxu0 %v314
    %394 = vmatpush1.bf16.msra.mxu0 %v313
    %395 = vmatprep.subr.bf16.mxu0 %v316
    %396 = vmatpush1.bf16.msra.mxu0 %v315
    %397 = vmatprep.subr.bf16.mxu0 %v318
    %398 = vmatpush1.bf16.msra.mxu0 %v317
    %399 = vmatprep.subr.bf16.mxu0 %v320
    %400 = vmatpush1.bf16.msra.mxu0 %v319
    %401 = vmatprep.subr.bf16.mxu0 %v322
    %402 = vmatpush1.bf16.msra.mxu0 %v321
    %403 = vmatprep.subr.bf16.mxu0 %v324
    %404 = vmatpush1.bf16.msra.mxu0 %v323
    %405 = vmatprep.subr.bf16.mxu0 %v326
    %406 = vmatpush1.bf16.msra.mxu0 %v325
    %407 = vmatprep.subr.bf16.mxu0 %v328
    %408 = vmatpush1.bf16.msra.mxu0 %v327
    %409 = vmatprep.subr.bf16.mxu0 0
    %410 = vmatpush1.bf16.msra.mxu0 0
    %411 = vmatprep.subr.bf16.mxu0 0
    %412 = vmatpush1.bf16.msra.mxu0 0
    %413 = vmatprep.subr.bf16.mxu0 0
    %414 = vmatpush1.bf16.msra.mxu0 0
    %415 = vmatprep.subr.bf16.mxu0 0
    %416 = vmatpush1.bf16.msra.mxu0 0
    %417 = vmatprep.subr.bf16.mxu0 0
    %418 = vmatpush1.bf16.msra.mxu0 0
    %419 = vmatprep.subr.bf16.mxu0 0
    %420 = vmatpush1.bf16.msra.mxu0 0
    %421 = vmatprep.subr.bf16.mxu0 0
    %422 = vmatpush1.bf16.msra.mxu0 0
    %423 = vmatprep.subr.bf16.mxu0 0
    %424 = vmatpush1.bf16.msra.mxu0 0
    %425 = vmatprep.mubr.bf16.mxu0 0
    %426 = vmatmul.mubr.bf16.gmra.mrb[0].mxu0 %v377
    %v427 = vpop.f32.mrb[0].mxu0
    %v428 = vadd.f32 0.0, %v427
    %v429 = vpop.f32.mrb[0].mxu0
    %v430 = vadd.f32 0.0, %v429
    %v431 = vpop.f32.mrb[0].mxu0
    %v432 = vadd.f32 0.0, %v431
    %v433 = vpop.f32.mrb[0].mxu0
    %v434 = vadd.f32 0.0, %v433
    %435 = vmatprep.mubr.bf16.mxu0 0
    %436 = vmatmul.mubr.bf16.gmra.mrb[0].mxu0 %v378
    %v437 = vpop.f32.mrb[0].mxu0
    %v438 = vadd.f32 0.0, %v437
    %v439 = vpop.f32.mrb[0].mxu0
    %v440 = vadd.f32 0.0, %v439
    %v441 = vpop.f32.mrb[0].mxu0
    %v442 = vadd.f32 0.0, %v441
    %v443 = vpop.f32.mrb[0].mxu0
    %v444 = vadd.f32 0.0, %v443
    %445 = vmatprep.mubr.bf16.mxu0 0
    %446 = vmatmul.mubr.bf16.gmra.mrb[0].mxu0 %v379
    %v447 = vpop.f32.mrb[0].mxu0
    %v448 = vadd.f32 0.0, %v447
    %v449 = vpop.f32.mrb[0].mxu0
    %v450 = vadd.f32 0.0, %v449
    %v451 = vpop.f32.mrb[0].mxu0
    %v452 = vadd.f32 0.0, %v451
    %v453 = vpop.f32.mrb[0].mxu0
    %v454 = vadd.f32 0.0, %v453
    %455 = vmatprep.mubr.bf16.mxu0 0
    %456 = vmatmul.mubr.bf16.gmra.mrb[0].mxu0 %v380
    %v457 = vpop.f32.mrb[0].mxu0
    %v458 = vadd.f32 0.0, %v457
    %v459 = vpop.f32.mrb[0].mxu0
    %v460 = vadd.f32 0.0, %v459
    %v461 = vpop.f32.mrb[0].mxu0
    %v462 = vadd.f32 0.0, %v461
    %v463 = vpop.f32.mrb[0].mxu0
    %v464 = vadd.f32 0.0, %v463
    %465 = vmatprep.mubr.bf16.mxu0 0
    %466 = vmatmul.mubr.bf16.gmra.mrb[0].mxu0 %v381
    %v467 = vpop.f32.mrb[0].mxu0
    %v468 = vadd.f32 0.0, %v467
    %v469 = vpop.f32.mrb[0].mxu0
    %v470 = vadd.f32 0.0, %v469
    %v471 = vpop.f32.mrb[0].mxu0
    %v472 = vadd.f32 0.0, %v471
    %v473 = vpop.f32.mrb[0].mxu0
    %v474 = vadd.f32 0.0, %v473
    %475 = vmatprep.mubr.bf16.mxu0 0
    %476 = vmatmul.mubr.bf16.gmra.mrb[0].mxu0 %v382
    %v477 = vpop.f32.mrb[0].mxu0
    %v478 = vadd.f32 0.0, %v477
    %v479 = vpop.f32.mrb[0].mxu0
    %v480 = vadd.f32 0.0, %v479
    %v481 = vpop.f32.mrb[0].mxu0
    %v482 = vadd.f32 0.0, %v481
    %v483 = vpop.f32.mrb[0].mxu0
    %v484 = vadd.f32 0.0, %v483
    %485 = vmatprep.mubr.bf16.mxu0 0
    %486 = vmatmul.mubr.bf16.gmra.mrb[0].mxu0 %v383
    %v487 = vpop.f32.mrb[0].mxu0
    %v488 = vadd.f32 0.0, %v487
    %v489 = vpop.f32.mrb[0].mxu0
    %v490 = vadd.f32 0.0, %v489
    %v491 = vpop.f32.mrb[0].mxu0
    %v492 = vadd.f32 0.0, %v491
    %v493 = vpop.f32.mrb[0].mxu0
    %v494 = vadd.f32 0.0, %v493
    %495 = vmatprep.mubr.bf16.mxu0 0
    %496 = vmatmul.mubr.bf16.gmra.mrb[0].mxu0 %v384
    %v497 = vpop.f32.mrb[0].mxu0
    %v498 = vadd.f32 0.0, %v497
    %v499 = vpop.f32.mrb[0].mxu0
    %v500 = vadd.f32 0.0, %v499
    %v501 = vpop.f32.mrb[0].mxu0
    %v502 = vadd.f32 0.0, %v501
    %v503 = vpop.f32.mrb[0].mxu0
    %v504 = vadd.f32 0.0, %v503
    %505 = vdwg.mxu0
    %v506 = vmul.f32 %v428, %v430
    %v507 = vmul.f32 %v432, %v434
    %v508 = vmul.f32 %v438, %v440
    %v509 = vmul.f32 %v442, %v444
    %v510 = vmul.f32 %v448, %v450
    %v511 = vmul.f32 %v452, %v454
    %v512 = vmul.f32 %v458, %v460
    %v513 = vmul.f32 %v462, %v464
    %v514 = vmul.f32 %v468, %v470
    %v515 = vmul.f32 %v472, %v474
    %v516 = vmul.f32 %v478, %v480
    %v517 = vmul.f32 %v482, %v484
    %v518 = vmul.f32 %v488, %v490
    %v519 = vmul.f32 %v492, %v494
    %v520 = vmul.f32 %v498, %v500
    %v521 = vmul.f32 %v502, %v504
    %v522 = vadd.f32 %v506, %v507
    %v523 = vadd.f32 %v522, %v508
    %v524 = vadd.f32 %v523, %v509
    %v525 = vadd.f32 %v524, %v510
    %v526 = vadd.f32 %v525, %v511
    %v527 = vadd.f32 %v526, %v512
    %v528 = vadd.f32 %v527, %v513
    %v529 = vadd.f32 %v528, %v514
    %v530 = vadd.f32 %v529, %v515
    %v531 = vadd.f32 %v530, %v516
    %v532 = vadd.f32 %v531, %v517
    %v533 = vadd.f32 %v532, %v518
    %v534 = vadd.f32 %v533, %v519
    %v535 = vadd.f32 %v534, %v520
    %v536 = vadd.f32 %v535, %v521
    %v537 = vrot.slane %v536, 4
    %v538 = vadd.f32 %v536, %v537
    %v539 = vrot.slane %v538, 2
    %v540 = vadd.f32 %v538, %v539
    %v541 = vrot.slane %v540, 1
    %v542 = vadd.f32 %v540, %v541
    %v543 = vxor.u32 %v542, 2147483648
    %v544 = vmul.f32 %v543, 1.442695
    %v545 = vpow.pop %v544
    %v546 = vadd.f32 %v545, 1.0
    %v547 = vrcp.pop %v546
    %v548 = vmul.f32 1.0, %v547
    %549 = vst [vmem:[#allocation7] sm:$0x1] %v548
    // Predicated region
    $region18: #{tpu_custom_call.1} parent=1 // pred_check
      _
    $region19: #{tpu_custom_call.1} parent=1 // pred_check_branch
      %551 = sbr.rel (0) target = $region21
    $region20: #{tpu_custom_call.1} parent=1 // pred_region
      %s553 = ssub.s32 16, 16
      %554 = vsyncadd [#allocation4], %s553
      %s556 = sshll.u32 [#allocation7], 4
      %s557 = int_to_ptr.vmem [resolvable:$true] %s556
      %559 = dma.vmem_to_hbm [thread:$0]  %s557, 16, %s2, [#allocation4]
    $region21: #{tpu_custom_call.1} parent=1 // pred_fallthru
      _
    // Predicated region
    $region22: #{tpu_custom_call.1} parent=1 // pred_check
      _
    $region23: #{tpu_custom_call.1} parent=1 // pred_check_branch
      %561 = sbr.rel (0) target = $region25
    $region24: #{tpu_custom_call.1} parent=1 // pred_region
      %562 = dma.done [#allocation4], 16
    $region25: #{tpu_custom_call.1} parent=1 // pred_fallthru
      _
    %563 = vsyncpa [#allocation3], 1
    %564 = vsyncpa [#allocation6], 1
    %565 = vsyncpa [#allocation4], 1

</llo_original>
